<compile_context>
chip_gen: v7x
topology: tpu7x:2x2x1
jax: 0.10.0
libtpu: 0.0.40
codegen_flags: <defaults>
</compile_context>

<pallas_src>
import jax
import jax.numpy as jnp
from jax.experimental import pallas as pl
from jax.experimental.pallas import tpu as pltpu


def _round_up(x: int, m: int) -> int:
    return ((x + m - 1) // m) * m


def inner_decoder_kernel(zu_ref, zc_ref, out_ref):
    # NT contraction on the shared feature axis (last axis of both operands);
    # MXU matmul with f32 accumulation, operands stay in their native dtype.
    logits = jax.lax.dot_general(
        zu_ref[...],
        zc_ref[...],
        dimension_numbers=(((1,), (1,)), ((), ())),
        preferred_element_type=jnp.float32,
    )
    # Epilogue: sigmoid (exp on the EUP slot) + single cast + lane-dense store.
    out_ref[...] = jax.nn.sigmoid(logits).astype(out_ref.dtype)


def inner_decoder(z_u, z_a, *, tm_max: int = 256, tn_max: int = 1024):
    """Pallas implementation of InnerDecoder.forward((z_u, z_a)).

    z_u: [N, D], z_a: [M, D]  ->  (adj [N, N], features [N, M])
    """
    n, d = z_u.shape
    m, d2 = z_a.shape
    assert d == d2, "z_u and z_a must share the feature dimension"
    out_dtype = z_u.dtype

    # Fused column space: rows of [z_u; z_a].
    p = n + m

    # Tile sizes: sublane-aligned rows, lane-dense (multiple-of-128) columns.
    tm = min(tm_max, _round_up(n, 8))
    tn = min(tn_max, _round_up(p, 128))
    n_pad = _round_up(n, tm)
    p_pad = _round_up(p, tn)

    # Zero-padded operands (padded rows/cols are sliced off after the call).
    zu_p = jnp.zeros((n_pad, d), out_dtype).at[:n, :].set(z_u)
    zc_p = (
        jnp.zeros((p_pad, d), out_dtype)
        .at[:n, :].set(z_u)
        .at[n:p, :].set(z_a.astype(out_dtype))
    )

    grid = (n_pad // tm, p_pad // tn)

    out = pl.pallas_call(
        inner_decoder_kernel,
        out_shape=jax.ShapeDtypeStruct((n_pad, p_pad), out_dtype),
        grid=grid,
        in_specs=[
            # Row tile of z_u, full D (D == full array dim, so no 128 rule).
            pl.BlockSpec((tm, d), lambda i, j: (i, 0)),
            # Column tile = row tile of the concatenated [z_u; z_a] matrix.
            pl.BlockSpec((tn, d), lambda i, j: (j, 0)),
        ],
        out_specs=pl.BlockSpec((tm, tn), lambda i, j: (i, j)),
        compiler_params=pltpu.CompilerParams(
            # Both output-tile axes are independent -> megacore sharding on v7x.
            dimension_semantics=("parallel", "parallel"),
            # Explicit scoped-VMEM budget; tiny usage, safe on v5e/v6e/v7x.
            vmem_limit_bytes=32 * 1024 * 1024,
        ),
    )(zu_p, zc_p)

    adj = out[:n, :n]
    features = out[:n, n:p]
    return adj, features


if __name__ == "__main__":
    key = jax.random.PRNGKey(0)
    k_u, k_a = jax.random.split(key)

    # Small shapes: N=8 "user" nodes, M=16 "attribute" nodes, D=32 latent dim.
    N, M, D = 8, 16, 32
    z_u = jax.random.normal(k_u, (N, D), dtype=jnp.float32)
    z_a = jax.random.normal(k_a, (M, D), dtype=jnp.float32)

    adj, features = inner_decoder(z_u, z_a)
    jax.block_until_ready((adj, features))

    # Reference check against plain JAX (same math as the PyTorch module).
    adj_ref = jax.nn.sigmoid(z_u @ z_u.T)
    feat_ref = jax.nn.sigmoid(z_u @ z_a.T)
    assert adj.shape == (N, N) and features.shape == (N, M)
    assert jnp.allclose(adj, adj_ref, atol=1e-5, rtol=1e-5)
    assert jnp.allclose(features, feat_ref, atol=1e-5, rtol=1e-5)

    print("KERNEL_OK")
</pallas_src>

<mosaic_0001>
module attributes {stable_mosaic.version = 11 : i64} {
  func.func @inner_decoder_kernel(%arg0: i32, %arg1: i32, %arg2: memref<8x32xf32, #tpu.memory_space<vmem>>, %arg3: memref<128x32xf32, #tpu.memory_space<vmem>>, %arg4: memref<8x128xf32, #tpu.memory_space<vmem>>) attributes {dimension_semantics = [#tpu.dimension_semantics<parallel>, #tpu.dimension_semantics<parallel>], iteration_bounds = array<i64: 1, 1>, scalar_prefetch = 0 : i64, scratch_operands = 0 : i64, tpu.core_type = #tpu.core_type<tc>, window_params = [{transform_indices = @transform_0, window_bounds = array<i64: 8, 32>}, {transform_indices = @transform_1, window_bounds = array<i64: 128, 32>}, {transform_indices = @transform_2, window_bounds = array<i64: 8, 128>}]} {
    %c0 = arith.constant 0 : index
    %c0_0 = arith.constant 0 : index
    %0 = vector.load %arg2[%c0, %c0_0] : memref<8x32xf32, #tpu.memory_space<vmem>>, vector<8x32xf32>
    %c0_1 = arith.constant 0 : index
    %c0_2 = arith.constant 0 : index
    %1 = vector.load %arg3[%c0_1, %c0_2] : memref<128x32xf32, #tpu.memory_space<vmem>>, vector<128x32xf32>
    %cst = arith.constant dense<0.000000e+00> : vector<8x128xf32>
    %2 = tpu.matmul %0, %1, %cst {dimension_numbers = #tpu.dot_dimension_numbers<[1], [1], [0], [0], [0, 0, 1, 0], [], []>} : vector<8x32xf32>, vector<128x32xf32>, vector<8x128xf32> -> vector<8x128xf32>
    %3 = arith.negf %2 : vector<8x128xf32>
    %4 = math.exp %3 : vector<8x128xf32>
    %cst_3 = arith.constant 1.000000e+00 : f32
    %5 = vector.broadcast %cst_3 : f32 to vector<8x128xf32>
    %6 = arith.addf %5, %4 : vector<8x128xf32>
    %7 = arith.divf %5, %6 : vector<8x128xf32>
    %c0_4 = arith.constant 0 : index
    %c0_5 = arith.constant 0 : index
    %8 = vector.load %arg4[%c0_4, %c0_5] : memref<8x128xf32, #tpu.memory_space<vmem>>, vector<8x128xf32>
    tpu.vector_store %arg4[%c0_4, %c0_5], %7 {strides = array<i32>} : memref<8x128xf32, #tpu.memory_space<vmem>>, vector<8x128xf32>,
    return
  }
  func.func @transform_0(%arg0: i32, %arg1: i32) -> (i32, i32) {
    %c0_i32 = arith.constant 0 : i32
    %c0_i32_0 = arith.constant 0 : i32
    return %arg0, %c0_i32 : i32, i32
  }
  func.func @transform_1(%arg0: i32, %arg1: i32) -> (i32, i32) {
    %c0_i32 = arith.constant 0 : i32
    %c0_i32_0 = arith.constant 0 : i32
    return %arg1, %c0_i32 : i32, i32
  }
  func.func @transform_2(%arg0: i32, %arg1: i32) -> (i32, i32) {
    %c0_i32 = arith.constant 0 : i32
    return %arg0, %arg1 : i32, i32
  }
}

</mosaic_0001>

<llo_original>
// kernel: tpu_custom_call.1
$region0: #{tpu_custom_call.1}
  #allocation0 [shape = 'u32[]', space=smem, size = 0x4, offset = 0x4, fixed_abs, tag = 'smem constant byte address 0x4 - core index']
  #allocation1 [shape = 'u32[144,128]{1,0:T(1,128)}', space=vmem, size = 0x12000, scoped, tag = 'internal scratch']
  %s0 = inlined_call_operand.vmem [shape: f32[8,32], index: 0, kind: input, shape index: {}]
  %s1 = inlined_call_operand.vmem [shape: f32[128,32], index: 1, kind: input, shape index: {}]
  %s2 = inlined_call_operand.hbm [shape: f32[8,128], index: 2, kind: output, shape index: {}]
  %s3 = sld [smem:[#allocation0]]
  $region18: #{tpu_custom_call.1} parent=0
    _
  %s5 = ssub.s32 1, %s3
  %s6 = scalar_select 0, %s5, %s3
  $region1: #{tpu_custom_call.1} parent=0
    #allocation2 [shape = 'u8[4096]{0}', space=vmem, size = 0x1000, scoped, tag = 'output window, operand 0, single buffered']
    #allocation3 [shape = 's32[1]{0}', space=sflag, size = 0x4, scoped, tag = 'scoped memory for tpu_custom_call.1']
    %7 = vsyncpa [#allocation3], 0
    // Predicated region
    $region2: #{tpu_custom_call.1} parent=1 // pred_check
      _
    $region3: #{tpu_custom_call.1} parent=1 // pred_check_branch
      %9 = sbr.rel (0) target = $region5
    $region4: #{tpu_custom_call.1} parent=1 // pred_region
      _
    $region5: #{tpu_custom_call.1} parent=1 // pred_fallthru
      _
    // Predicated region
    $region6: #{tpu_custom_call.1} parent=1 // pred_check
      _
    $region7: #{tpu_custom_call.1} parent=1 // pred_check_branch
      %11 = sbr.rel (0) target = $region9
    $region8: #{tpu_custom_call.1} parent=1 // pred_region
      _
    $region9: #{tpu_custom_call.1} parent=1 // pred_fallthru
      _
    %v12 = vld [vmem:[%s0] sm:$0xff]
    %v13 = vld [vmem:[%s1] sm:$0xff]
    %v14 = vld [vmem:[%s1 + $0x8] sm:$0xff]
    %v15 = vld [vmem:[%s1 + $0x10] sm:$0xff]
    %v16 = vld [vmem:[%s1 + $0x18] sm:$0xff]
    %v17 = vld [vmem:[%s1 + $0x20] sm:$0xff]
    %v18 = vld [vmem:[%s1 + $0x28] sm:$0xff]
    %v19 = vld [vmem:[%s1 + $0x30] sm:$0xff]
    %v20 = vld [vmem:[%s1 + $0x38] sm:$0xff]
    %v21 = vld [vmem:[%s1 + $0x40] sm:$0xff]
    %v22 = vld [vmem:[%s1 + $0x48] sm:$0xff]
    %v23 = vld [vmem:[%s1 + $0x50] sm:$0xff]
    %v24 = vld [vmem:[%s1 + $0x58] sm:$0xff]
    %v25 = vld [vmem:[%s1 + $0x60] sm:$0xff]
    %v26 = vld [vmem:[%s1 + $0x68] sm:$0xff]
    %v27 = vld [vmem:[%s1 + $0x70] sm:$0xff]
    %v28 = vld [vmem:[%s1 + $0x78] sm:$0xff]
    %vm29 = vcmask 261120
    %v31 = vsel %vm29, %v12, 0
    %v34 = vsel %vm29, %v13, 0
    %v37 = vsel %vm29, %v14, 0
    %v40 = vsel %vm29, %v15, 0
    %v43 = vsel %vm29, %v16, 0
    %v46 = vsel %vm29, %v17, 0
    %v49 = vsel %vm29, %v18, 0
    %v52 = vsel %vm29, %v19, 0
    %v55 = vsel %vm29, %v20, 0
    %v58 = vsel %vm29, %v21, 0
    %v61 = vsel %vm29, %v22, 0
    %v64 = vsel %vm29, %v23, 0
    %v67 = vsel %vm29, %v24, 0
    %v70 = vsel %vm29, %v25, 0
    %v73 = vsel %vm29, %v26, 0
    %v76 = vsel %vm29, %v27, 0
    %v79 = vsel %vm29, %v28, 0
    %81 = vmatprep.subr.mxu0 0.0
    %82 = vmatpush1.xpose.msra.mxu0 %v34
    %83 = vmatprep.subr.mxu0 0.0
    %84 = vmatpush1.xpose.msra.mxu0 %v37
    %85 = vmatprep.subr.mxu0 0.0
    %86 = vmatpush1.xpose.msra.mxu0 %v40
    %87 = vmatprep.subr.mxu0 0.0
    %88 = vmatpush1.xpose.msra.mxu0 %v43
    %89 = vmatprep.subr.mxu0 0.0
    %90 = vmatpush1.xpose.msra.mxu0 %v46
    %91 = vmatprep.subr.mxu0 0.0
    %92 = vmatpush1.xpose.msra.mxu0 %v49
    %93 = vmatprep.subr.mxu0 0.0
    %94 = vmatpush1.xpose.msra.mxu0 %v52
    %95 = vmatprep.subr.mxu0 0.0
    %96 = vmatpush1.xpose.msra.mxu0 %v55
    %97 = vmatprep.subr.mxu0 0.0
    %98 = vmatpush1.xpose.msra.mxu0 %v58
    %99 = vmatprep.subr.mxu0 0.0
    %100 = vmatpush1.xpose.msra.mxu0 %v61
    %101 = vmatprep.subr.mxu0 0.0
    %102 = vmatpush1.xpose.msra.mxu0 %v64
    %103 = vmatprep.subr.mxu0 0.0
    %104 = vmatpush1.xpose.msra.mxu0 %v67
    %105 = vmatprep.subr.mxu0 0.0
    %106 = vmatpush1.xpose.msra.mxu0 %v70
    %107 = vmatprep.subr.mxu0 0.0
    %108 = vmatpush1.xpose.msra.mxu0 %v73
    %109 = vmatprep.subr.mxu0 0.0
    %110 = vmatpush1.xpose.msra.mxu0 %v76
    %111 = vmatprep.subr.mxu0 0.0
    %112 = vmatpush1.xpose.msra.mxu0 %v79
    %113 = vmatprep.subr.mxu0 0.0
    %114 = vmatpush1.xpose.msra.mxu0 0.0
    %115 = vmatprep.subr.mxu0 0.0
    %116 = vmatpush1.xpose.msra.mxu0 0.0
    %117 = vmatprep.subr.mxu0 0.0
    %118 = vmatpush1.xpose.msra.mxu0 0.0
    %119 = vmatprep.subr.mxu0 0.0
    %120 = vmatpush1.xpose.msra.mxu0 0.0
    %121 = vmatprep.subr.mxu0 0.0
    %122 = vmatpush1.xpose.msra.mxu0 0.0
    %123 = vmatprep.subr.mxu0 0.0
    %124 = vmatpush1.xpose.msra.mxu0 0.0
    %125 = vmatprep.subr.mxu0 0.0
    %126 = vmatpush1.xpose.msra.mxu0 0.0
    %127 = vmatprep.subr.mxu0 0.0
    %128 = vmatpush1.xpose.msra.mxu0 0.0
    %129 = vmatprep.subr.mxu0 0.0
    %130 = vmatpush1.xpose.msra.mxu0 0.0
    %131 = vmatprep.subr.mxu0 0.0
    %132 = vmatpush1.xpose.msra.mxu0 0.0
    %133 = vmatprep.subr.mxu0 0.0
    %134 = vmatpush1.xpose.msra.mxu0 0.0
    %135 = vmatprep.subr.mxu0 0.0
    %136 = vmatpush1.xpose.msra.mxu0 0.0
    %137 = vmatprep.subr.mxu0 0.0
    %138 = vmatpush1.xpose.msra.mxu0 0.0
    %139 = vmatprep.subr.mxu0 0.0
    %140 = vmatpush1.xpose.msra.mxu0 0.0
    %141 = vmatprep.subr.mxu0 0.0
    %142 = vmatpush1.xpose.msra.mxu0 0.0
    %143 = vmatprep.subr.mxu0 0.0
    %144 = vmatpush1.xpose.msra.mxu0 0.0
    %145 = vmatprep.mubr.f32.mxu0 0.0
    %146 = vmatmul.mubr.f32.gmra.mrb[0].mxu0 %v31
    %v147 = vpop.f32.mrb[0].mxu0
    %v148 = vadd.f32 0.0, %v147
    %v149 = vpop.f32.mrb[0].mxu0
    %150 = vdwg.mxu0
    %v151 = vxor.u32 %v148, 2147483648
    %v152 = vmul.f32 %v151, 1.442695
    %v153 = vpow.pop %v152
    %v154 = vadd.f32 %v153, 1.0
    %v155 = vrcp.pop %v154
    %v156 = vmul.f32 1.0, %v155
    %157 = vst [vmem:[#allocation2] sm:$0xff] %v156
    // Predicated region
    $region10: #{tpu_custom_call.1} parent=1 // pred_check
      _
    $region11: #{tpu_custom_call.1} parent=1 // pred_check_branch
      %159 = sbr.rel (0) target = $region13
    $region12: #{tpu_custom_call.1} parent=1 // pred_region
      %s161 = ssub.s32 128, 128
      %162 = vsyncadd [#allocation3], %s161
      %s164 = sshll.u32 [#allocation2], 4
      %s165 = int_to_ptr.vmem [resolvable:$true] %s164
      %167 = dma.vmem_to_hbm [thread:$0]  %s165, 128, %s2, [#allocation3]
    $region13: #{tpu_custom_call.1} parent=1 // pred_fallthru
      _
    // Predicated region
    $region14: #{tpu_custom_call.1} parent=1 // pred_check
      _
    $region15: #{tpu_custom_call.1} parent=1 // pred_check_branch
      %169 = sbr.rel (0) target = $region17
    $region16: #{tpu_custom_call.1} parent=1 // pred_region
      %170 = dma.done [#allocation3], 128
    $region17: #{tpu_custom_call.1} parent=1 // pred_fallthru
      _
    %171 = vsyncpa [#allocation3], 1

</llo_original>
